<compile_context>
chip_gen: v5e
topology: v5e:2x2
jax: 0.10.0
libtpu: 0.0.40
codegen_flags: <defaults>
</compile_context>

<pallas_src>
import jax
import jax.numpy as jnp
from jax.experimental import pallas as pl
from jax.experimental.pallas import tpu as pltpu

IN_FEATURES = 784
HIDDEN = 21
OUT = 10
H_PAD = 128          # hidden lanes padded 21 -> 128 (lane-dense)
O_PAD = 128          # output lanes padded 10 -> 128 (lane-dense)
MAX_TILE_B = 2048    # rows per grid step; amortizes ~0.35us/step overhead
TILE_GRAN = 16       # tile granularity: 16 sublanes (bf16 output packing)
VMEM_LIMIT_BYTES = 32 * 1024 * 1024   # covers 2x(2048x784 f32) + out + weights


def _round_up(n, m):
    return ((n + m - 1) // m) * m


def _dim_semantics(num_tiles):
    """CORE_PARALLEL on v7x (2 TCs/chip) when there is >1 tile; else parallel."""
    kind = jax.devices()[0].device_kind.lower()
    if num_tiles >= 2 and ("v7" in kind or "tpu7" in kind):
        return (pltpu.CORE_PARALLEL,)
    return ("parallel",)


def mlp_kernel(x_ref, w1_ref, b1_ref, w2_ref, b2_ref, out_ref):
    # x_ref:  (TILE_B, 784) f32  (streamed from HBM, double-buffered)
    # w1_ref: (784, 128) bf16   b1_ref: (1, 128) f32
    # w2_ref: (128, 128) bf16   b2_ref: (1, 128) f32
    # out_ref: (TILE_B, 128) bf16 (lane-dense writeback)
    x_bf = x_ref[...].astype(jnp.bfloat16)            # in-register cast, free
    h = jnp.dot(x_bf, w1_ref[...], preferred_element_type=jnp.float32)
    h = jnp.maximum(h + b1_ref[...], 0.0)             # bias + ReLU in f32
    o = jnp.dot(h.astype(jnp.bfloat16), w2_ref[...],
                preferred_element_type=jnp.float32)
    o = jnp.maximum(o + b2_ref[...], 0.0)             # bias + ReLU in f32
    out_ref[...] = o.astype(out_ref.dtype)


def prepare_params(w1, b1, w2, b2):
    """Pad weights/biases to 128 lanes ONCE, outside the jitted forward.

    Zero lanes stay exactly zero through bias-add + ReLU, so slicing the
    output is exact.  Weights are bf16 (MXU inputs), biases stay f32.
    """
    w1p = jnp.zeros((IN_FEATURES, H_PAD), jnp.bfloat16)
    w1p = w1p.at[:, :HIDDEN].set(w1.astype(jnp.bfloat16))
    b1p = jnp.zeros((1, H_PAD), jnp.float32)
    b1p = b1p.at[:, :HIDDEN].set(b1.reshape(1, HIDDEN).astype(jnp.float32))
    w2p = jnp.zeros((H_PAD, O_PAD), jnp.bfloat16)
    w2p = w2p.at[:HIDDEN, :OUT].set(w2.astype(jnp.bfloat16))
    b2p = jnp.zeros((1, O_PAD), jnp.float32)
    b2p = b2p.at[:, :OUT].set(b2.reshape(1, OUT).astype(jnp.float32))
    return w1p, b1p, w2p, b2p


@jax.jit
def mlp_net0_forward(x_nchw, w1p, b1p, w2p, b2p):
    """x_nchw: [B, 1, 28, 28] f32.  Params from prepare_params().

    Returns [B, 10] f32 = relu(relu(flatten(x) @ w1 + b1) @ w2 + b2).
    """
    B = x_nchw.shape[0]
    x_flat = x_nchw.reshape(B, -1)
    assert x_flat.shape[1] == IN_FEATURES
    x_flat = x_flat.astype(jnp.float32)   # no-op for f32 callers; stream f32 directly

    # Batch tile: multiple of 16 sublanes (bf16 out packing), capped at
    # MAX_TILE_B.  Ragged last tile handled by the cdiv grid (no jnp.pad copy).
    tile_b = min(MAX_TILE_B, _round_up(B, TILE_GRAN))
    num_tiles = pl.cdiv(B, tile_b)
    grid = (num_tiles,)

    cost = pl.CostEstimate(
        flops=2 * B * IN_FEATURES * H_PAD + 2 * B * H_PAD * O_PAD,
        transcendentals=0,
        bytes_accessed=(B * IN_FEATURES * 4            # x (f32, streamed)
                        + IN_FEATURES * H_PAD * 2      # w1 (bf16)
                        + H_PAD * O_PAD * 2            # w2 (bf16)
                        + (H_PAD + O_PAD) * 4          # biases (f32)
                        + B * O_PAD * 2),              # out (bf16)
    )

    out_padded = pl.pallas_call(
        mlp_kernel,
        out_shape=jax.ShapeDtypeStruct((B, O_PAD), jnp.bfloat16),
        grid=grid,
        in_specs=[
            # x streams by batch tile (double-buffered by the Pallas pipeline).
            pl.BlockSpec((tile_b, IN_FEATURES), lambda i: (i, 0)),
            # Weights/biases: constant index_map -> loaded once, VMEM-resident.
            pl.BlockSpec((IN_FEATURES, H_PAD), lambda i: (0, 0)),
            pl.BlockSpec((1, H_PAD), lambda i: (0, 0)),
            pl.BlockSpec((H_PAD, O_PAD), lambda i: (0, 0)),
            pl.BlockSpec((1, O_PAD), lambda i: (0, 0)),
        ],
        out_specs=pl.BlockSpec((tile_b, O_PAD), lambda i: (i, 0)),
        compiler_params=pltpu.CompilerParams(
            dimension_semantics=_dim_semantics(num_tiles),
            vmem_limit_bytes=VMEM_LIMIT_BYTES,
        ),
        cost_estimate=cost,
    )(x_flat, w1p, b1p, w2p, b2p)

    # Slice off padded lanes / ragged rows; cast tiny [B,10] back to f32.
    return out_padded[:B, :OUT].astype(jnp.float32)


def init_params(key):
    """Deterministic init matching nn.Linear (uniform(-1/sqrt(fan_in), +))."""
    k1, k2, k3, k4 = jax.random.split(key, 4)
    lim1 = 1.0 / jnp.sqrt(784.0)
    lim2 = 1.0 / jnp.sqrt(21.0)
    # Stored as [in, out] (transpose of PyTorch's [out, in]) so the kernel does x @ W.
    w1 = jax.random.uniform(k1, (IN_FEATURES, HIDDEN), jnp.float32, -lim1, lim1)
    b1 = jax.random.uniform(k2, (HIDDEN,), jnp.float32, -lim1, lim1)
    w2 = jax.random.uniform(k3, (HIDDEN, OUT), jnp.float32, -lim2, lim2)
    b2 = jax.random.uniform(k4, (OUT,), jnp.float32, -lim2, lim2)
    return w1, b1, w2, b2


if __name__ == "__main__":
    key = jax.random.PRNGKey(0)
    kx, kp = jax.random.split(key)

    # Small MNIST-like batch (NCHW; in_features=784 implies 1x28x28).
    x = jax.random.normal(kx, (2, 1, 28, 28), jnp.float32)
    w1, b1, w2, b2 = init_params(kp)
    w1p, b1p, w2p, b2p = prepare_params(w1, b1, w2, b2)   # padded once, outside jit

    out = mlp_net0_forward(x, w1p, b1p, w2p, b2p)
    out = jax.block_until_ready(out)

    # Pure-JAX f32 reference (kernel uses bf16 MXU inputs + bf16 output with
    # f32 accumulation, so compare with a bf16-appropriate tolerance).
    xf = x.reshape(2, -1)
    ref = jnp.maximum(jnp.maximum(xf @ w1 + b1[None, :], 0.0) @ w2 + b2[None, :], 0.0)
    assert out.shape == (2, 10)
    assert jnp.allclose(out, ref, atol=3e-2, rtol=3e-2), (
        f"max abs err = {jnp.max(jnp.abs(out - ref))}")

    print("KERNEL_OK")
</pallas_src>

<mosaic_0001>
module attributes {stable_mosaic.version = 11 : i64} {
  func.func @mlp_kernel(%arg0: i32, %arg1: memref<16x784xf32, #tpu.memory_space<vmem>>, %arg2: memref<784x128xbf16, #tpu.memory_space<vmem>>, %arg3: memref<1x128xf32, #tpu.memory_space<vmem>>, %arg4: memref<128x128xbf16, #tpu.memory_space<vmem>>, %arg5: memref<1x128xf32, #tpu.memory_space<vmem>>, %arg6: memref<16x128xbf16, #tpu.memory_space<vmem>>) attributes {dimension_semantics = [#tpu.dimension_semantics<parallel>], iteration_bounds = array<i64: 1>, scalar_prefetch = 0 : i64, scratch_operands = 0 : i64, tpu.core_type = #tpu.core_type<tc>, window_params = [{transform_indices = @transform_0, window_bounds = array<i64: 16, 784>}, {pipeline_mode = #tpu.pipeline_mode<synchronous>, transform_indices = @transform_1, window_bounds = array<i64: 784, 128>}, {pipeline_mode = #tpu.pipeline_mode<synchronous>, transform_indices = @transform_2, window_bounds = array<i64: 1, 128>}, {pipeline_mode = #tpu.pipeline_mode<synchronous>, transform_indices = @transform_3, window_bounds = array<i64: 128, 128>}, {pipeline_mode = #tpu.pipeline_mode<synchronous>, transform_indices = @transform_4, window_bounds = array<i64: 1, 128>}, {transform_indices = @transform_5, window_bounds = array<i64: 16, 128>}]} {
    %c0 = arith.constant 0 : index
    %c0_0 = arith.constant 0 : index
    %0 = vector.load %arg1[%c0, %c0_0] : memref<16x784xf32, #tpu.memory_space<vmem>>, vector<16x784xf32>
    %1 = arith.truncf %0 : vector<16x784xf32> to vector<16x784xbf16>
    %c0_1 = arith.constant 0 : index
    %c0_2 = arith.constant 0 : index
    %2 = vector.load %arg2[%c0_1, %c0_2] : memref<784x128xbf16, #tpu.memory_space<vmem>>, vector<784x128xbf16>
    %cst = arith.constant dense<0.000000e+00> : vector<16x128xf32>
    %3 = tpu.matmul %1, %2, %cst {dimension_numbers = #tpu.dot_dimension_numbers<[1], [0], [0], [1], [0, 0, 1, 1], [], []>} : vector<16x784xbf16>, vector<784x128xbf16>, vector<16x128xf32> -> vector<16x128xf32>
    %c0_3 = arith.constant 0 : index
    %c0_4 = arith.constant 0 : index
    %4 = vector.load %arg3[%c0_3, %c0_4] : memref<1x128xf32, #tpu.memory_space<vmem>>, vector<1x128xf32>
    %5 = vector.broadcast %4 : vector<1x128xf32> to vector<16x128xf32>
    %6 = arith.addf %3, %5 : vector<16x128xf32>
    %cst_5 = arith.constant 0.000000e+00 : f32
    %7 = vector.broadcast %cst_5 : f32 to vector<16x128xf32>
    %8 = arith.maximumf %6, %7 : vector<16x128xf32>
    %9 = arith.truncf %8 : vector<16x128xf32> to vector<16x128xbf16>
    %c0_6 = arith.constant 0 : index
    %c0_7 = arith.constant 0 : index
    %10 = vector.load %arg4[%c0_6, %c0_7] : memref<128x128xbf16, #tpu.memory_space<vmem>>, vector<128x128xbf16>
    %cst_8 = arith.constant dense<0.000000e+00> : vector<16x128xf32>
    %11 = tpu.matmul %9, %10, %cst_8 {dimension_numbers = #tpu.dot_dimension_numbers<[1], [0], [0], [1], [0, 0, 1, 1], [], []>} : vector<16x128xbf16>, vector<128x128xbf16>, vector<16x128xf32> -> vector<16x128xf32>
    %c0_9 = arith.constant 0 : index
    %c0_10 = arith.constant 0 : index
    %12 = vector.load %arg5[%c0_9, %c0_10] : memref<1x128xf32, #tpu.memory_space<vmem>>, vector<1x128xf32>
    %13 = vector.broadcast %12 : vector<1x128xf32> to vector<16x128xf32>
    %14 = arith.addf %11, %13 : vector<16x128xf32>
    %cst_11 = arith.constant 0.000000e+00 : f32
    %15 = vector.broadcast %cst_11 : f32 to vector<16x128xf32>
    %16 = arith.maximumf %14, %15 : vector<16x128xf32>
    %17 = arith.truncf %16 : vector<16x128xf32> to vector<16x128xbf16>
    %c0_12 = arith.constant 0 : index
    %c0_13 = arith.constant 0 : index
    %18 = vector.load %arg6[%c0_12, %c0_13] : memref<16x128xbf16, #tpu.memory_space<vmem>>, vector<16x128xbf16>
    tpu.vector_store %arg6[%c0_12, %c0_13], %17 {strides = array<i32>} : memref<16x128xbf16, #tpu.memory_space<vmem>>, vector<16x128xbf16>,
    return
  }
  func.func @transform_0(%arg0: i32) -> (i32, i32) {
    %c0_i32 = arith.constant 0 : i32
    %c0_i32_0 = arith.constant 0 : i32
    return %arg0, %c0_i32 : i32, i32
  }
  func.func @transform_1(%arg0: i32) -> (i32, i32) {
    %c0_i32 = arith.constant 0 : i32
    %c0_i32_0 = arith.constant 0 : i32
    %c0_i32_1 = arith.constant 0 : i32
    return %c0_i32, %c0_i32_0 : i32, i32
  }
  func.func @transform_2(%arg0: i32) -> (i32, i32) {
    %c0_i32 = arith.constant 0 : i32
    %c0_i32_0 = arith.constant 0 : i32
    %c0_i32_1 = arith.constant 0 : i32
    return %c0_i32, %c0_i32_0 : i32, i32
  }
  func.func @transform_3(%arg0: i32) -> (i32, i32) {
    %c0_i32 = arith.constant 0 : i32
    %c0_i32_0 = arith.constant 0 : i32
    %c0_i32_1 = arith.constant 0 : i32
    return %c0_i32, %c0_i32_0 : i32, i32
  }
  func.func @transform_4(%arg0: i32) -> (i32, i32) {
    %c0_i32 = arith.constant 0 : i32
    %c0_i32_0 = arith.constant 0 : i32
    %c0_i32_1 = arith.constant 0 : i32
    return %c0_i32, %c0_i32_0 : i32, i32
  }
  func.func @transform_5(%arg0: i32) -> (i32, i32) {
    %c0_i32 = arith.constant 0 : i32
    %c0_i32_0 = arith.constant 0 : i32
    return %arg0, %c0_i32 : i32, i32
  }
}

</mosaic_0001>

<llo_original>
// kernel: mlp_net0_forward.1
$region0: #{mlp_net0_forward.1}
  #allocation0 [shape = 'u32[]', space=smem, size = 0x4, offset = 0x4, fixed_abs, tag = 'smem constant byte address 0x4 - core index']
  #allocation1 [shape = 'u32[72,128]{1,0:T(1,128)}', space=vmem, size = 0x9000, scoped, tag = 'internal scratch']
  %s0 = inlined_call_operand.vmem [shape: f32[2,784], index: 0, kind: input, shape index: {}]
  %s1 = inlined_call_operand.hbm [shape: bf16[784,128], index: 1, kind: input, shape index: {}]
  %s2 = inlined_call_operand.vmem [shape: f32[1,128], index: 2, kind: input, shape index: {}]
  %s3 = inlined_call_operand.vmem [shape: bf16[128,128], index: 3, kind: input, shape index: {}]
  %s4 = inlined_call_operand.vmem [shape: f32[1,128], index: 4, kind: input, shape index: {}]
  %s5 = inlined_call_operand.vmem [shape: bf16[2,128], index: 5, kind: output, shape index: {}]
  %s6 = sld [smem:[#allocation0]]
  $region64: #{mlp_net0_forward.1} parent=0
    _
  %s8 = ssub.s32 1, %s6
  %s9 = scalar_select 0, %s8, %s6
  $region1: #{mlp_net0_forward.1} parent=0
    #allocation2 [shape = 'u8[200704]{0}', space=vmem, size = 0x31000, scoped, tag = 'input window, operand 1, single buffered']
    #allocation3 [shape = 's32[1]{0}', space=sflag, size = 0x4, scoped, tag = 'scoped memory for mlp_net0_forward.1']
    #allocation4 [shape = 'u8[4096]{0}', space=vmem, size = 0x1000, scoped, tag = 'output window, operand 0, single buffered']
    %10 = vsyncpa [#allocation3], 0
    // Predicated region
    $region2: #{mlp_net0_forward.1} parent=1 // pred_check
      _
    $region3: #{mlp_net0_forward.1} parent=1 // pred_check_branch
      %12 = sbr.rel (0) target = $region5
    $region4: #{mlp_net0_forward.1} parent=1 // pred_region
      _
    $region5: #{mlp_net0_forward.1} parent=1 // pred_fallthru
      _
    // Predicated region
    $region6: #{mlp_net0_forward.1} parent=1 // pred_check
      _
    $region7: #{mlp_net0_forward.1} parent=1 // pred_check_branch
      %14 = sbr.rel (0) target = $region9
    $region8: #{mlp_net0_forward.1} parent=1 // pred_region
      %16 = vsyncadd [#allocation3], 0
      %s17 = sshll.u32 %s1, 4
      %s18 = int_to_ptr.hbm [resolvable:$true] %s17
      %s19 = sshll.u32 [#allocation2], 4
      %s20 = int_to_ptr.vmem [resolvable:$true] %s19
      %25 = dma.hbm_to_vmem [thread:$0]  %s18, 6272, %s20, [#allocation3], 64, 64, 4
    $region9: #{mlp_net0_forward.1} parent=1 // pred_fallthru
      _
    // Predicated region
    $region10: #{mlp_net0_forward.1} parent=1 // pred_check
      _
    $region11: #{mlp_net0_forward.1} parent=1 // pred_check_branch
      %27 = sbr.rel (0) target = $region13
    $region12: #{mlp_net0_forward.1} parent=1 // pred_region
      _
    $region13: #{mlp_net0_forward.1} parent=1 // pred_fallthru
      _
    // Predicated region
    $region14: #{mlp_net0_forward.1} parent=1 // pred_check
      _
    $region15: #{mlp_net0_forward.1} parent=1 // pred_check_branch
      %29 = sbr.rel (0) target = $region17
    $region16: #{mlp_net0_forward.1} parent=1 // pred_region
      _
    $region17: #{mlp_net0_forward.1} parent=1 // pred_fallthru
      _
    // Predicated region
    $region18: #{mlp_net0_forward.1} parent=1 // pred_check
      _
    $region19: #{mlp_net0_forward.1} parent=1 // pred_check_branch
      %31 = sbr.rel (0) target = $region21
    $region20: #{mlp_net0_forward.1} parent=1 // pred_region
      _
    $region21: #{mlp_net0_forward.1} parent=1 // pred_fallthru
      _
    // Predicated region
    $region22: #{mlp_net0_forward.1} parent=1 // pred_check
      _
    $region23: #{mlp_net0_forward.1} parent=1 // pred_check_branch
      %33 = sbr.rel (0) target = $region25
    $region24: #{mlp_net0_forward.1} parent=1 // pred_region
      %35 = dma.done [#allocation3], 6272
    $region25: #{mlp_net0_forward.1} parent=1 // pred_fallthru
      _
    %v37 = vld [vmem:[%s0] sm:$0xff]
    %v38 = vld [vmem:[%s0 + $0x8] sm:$0x3f]
    %v39 = vld [vmem:[%s0 + $0xe] sm:$0xff]
    %v40 = vld [vmem:[%s0 + $0x16] sm:$0x3f]
    %v41 = vld [vmem:[%s0 + $0x1c] sm:$0xff]
    %v42 = vld [vmem:[%s0 + $0x24] sm:$0x3f]
    %v43 = vld [vmem:[%s0 + $0x2a] sm:$0xff]
    %v44 = vld [vmem:[%s0 + $0x32] sm:$0x3f]
    %v45 = vld [vmem:[%s0 + $0x38] sm:$0xff]
    %v46 = vld [vmem:[%s0 + $0x40] sm:$0x3f]
    %v47 = vld [vmem:[%s0 + $0x46] sm:$0xff]
    %v48 = vld [vmem:[%s0 + $0x4e] sm:$0x3f]
    %v49 = vld [vmem:[%s0 + $0x54] sm:$0xff]
    %v50 = vld [vmem:[%s0 + $0x5c] sm:$0x3f]
    %v51 = vld [vmem:[%s0 + $0x62] sm:$0xff]
    %v52 = vld [vmem:[%s0 + $0x6a] sm:$0x3f]
    %69 = vst [vmem:[#allocation1] ss:$4 sm:$0xff] %v37
    %s70 = scalar_lea.vmem [#allocation1], 1
    %71 = vst [vmem:[%s70] ss:$4 sm:$0xff] %v39
    %s72 = scalar_lea.vmem [#allocation1], 2
    %73 = vst [vmem:[%s72] ss:$4 sm:$0xff] %v41
    %s74 = scalar_lea.vmem [#allocation1], 3
    %75 = vst [vmem:[%s74] ss:$4 sm:$0xff] %v43
    %s76 = scalar_lea.vmem [#allocation1], 32
    %77 = vst [vmem:[%s76] ss:$4 sm:$0xff] %v38
    %s78 = scalar_lea.vmem [#allocation1], 33
    %79 = vst [vmem:[%s78] ss:$4 sm:$0xff] %v40
    %s80 = scalar_lea.vmem [#allocation1], 34
    %81 = vst [vmem:[%s80] ss:$4 sm:$0xff] %v42
    %s82 = scalar_lea.vmem [#allocation1], 35
    %83 = vst [vmem:[%s82] ss:$4 sm:$0xff] %v44
    %v84 = vld.sshfl [vmem:[#allocation1] sm:$0xff pattern:$0x73625140]
    %v85 = vld.sshfl [vmem:[#allocation1 + $0x8] sm:$0xff pattern:$0x73625140]
    %v86 = vld.sshfl [vmem:[#allocation1 + $0x10] sm:$0xff pattern:$0x73625140]
    %v87 = vld.sshfl [vmem:[#allocation1 + $0x18] sm:$0xff pattern:$0x73625140]
    %v88 = vld.sshfl [vmem:[#allocation1 + $0x20] sm:$0xff pattern:$0x73625140]
    %v89 = vld.sshfl [vmem:[#allocation1 + $0x28] sm:$0xff pattern:$0x73625140]
    %v90 = vld.sshfl [vmem:[#allocation1 + $0x30] sm:$0xff pattern:$0x73625140]
    %91 = vst [vmem:[#allocation1] ss:$4 sm:$0xff] %v45
    %92 = vst [vmem:[%s70] ss:$4 sm:$0xff] %v47
    %93 = vst [vmem:[%s72] ss:$4 sm:$0xff] %v49
    %94 = vst [vmem:[%s74] ss:$4 sm:$0xff] %v51
    %95 = vst [vmem:[%s76] ss:$4 sm:$0xff] %v46
    %96 = vst [vmem:[%s78] ss:$4 sm:$0xff] %v48
    %97 = vst [vmem:[%s80] ss:$4 sm:$0xff] %v50
    %98 = vst [vmem:[%s82] ss:$4 sm:$0xff] %v52
    %v99 = vld.sshfl [vmem:[#allocation1] sm:$0xff pattern:$0x73625140]
    %v100 = vld.sshfl [vmem:[#allocation1 + $0x8] sm:$0xff pattern:$0x73625140]
    %v101 = vld.sshfl [vmem:[#allocation1 + $0x10] sm:$0xff pattern:$0x73625140]
    %v102 = vld.sshfl [vmem:[#allocation1 + $0x18] sm:$0xff pattern:$0x73625140]
    %v103 = vld.sshfl [vmem:[#allocation1 + $0x20] sm:$0xff pattern:$0x73625140]
    %v104 = vld.sshfl [vmem:[#allocation1 + $0x28] sm:$0xff pattern:$0x73625140]
    %v105 = vld.sshfl [vmem:[#allocation1 + $0x30] sm:$0xff pattern:$0x73625140]
    %v120 = vpack.c.bf16 %v99, %v84
    %v121 = vpack.c.bf16 %v100, %v85
    %v122 = vpack.c.bf16 %v101, %v86
    %v123 = vpack.c.bf16 %v102, %v87
    %v124 = vpack.c.bf16 %v103, %v88
    %v125 = vpack.c.bf16 %v104, %v89
    %v126 = vpack.c.bf16 %v105, %v90
    %v127 = vld [vmem:[#allocation2] sm:$0xf]
    %v128 = vld [vmem:[#allocation2 + $0x4] sm:$0xf]
    %v129 = vld [vmem:[#allocation2 + $0x8] sm:$0xf]
    %v130 = vld [vmem:[#allocation2 + $0xc] sm:$0xf]
    %v131 = vld [vmem:[#allocation2 + $0x10] sm:$0xf]
    %v132 = vld [vmem:[#allocation2 + $0x14] sm:$0xf]
    %v133 = vld [vmem:[#allocation2 + $0x18] sm:$0xf]
    %v134 = vld [vmem:[#allocation2 + $0x1c] sm:$0xf]
    %v135 = vld [vmem:[#allocation2 + $0x20] sm:$0xf]
    %v136 = vld [vmem:[#allocation2 + $0x24] sm:$0xf]
    %v137 = vld [vmem:[#allocation2 + $0x28] sm:$0xf]
    %v138 = vld [vmem:[#allocation2 + $0x2c] sm:$0xf]
    %v139 = vld [vmem:[#allocation2 + $0x30] sm:$0xf]
    %v140 = vld [vmem:[#allocation2 + $0x34] sm:$0xf]
    %v141 = vld [vmem:[#allocation2 + $0x38] sm:$0xf]
    %v142 = vld [vmem:[#allocation2 + $0x3c] sm:$0xf]
    %v143 = vld [vmem:[#allocation2 + $0x40] sm:$0xf]
    %v144 = vld [vmem:[#allocation2 + $0x44] sm:$0xf]
    %v145 = vld [vmem:[#allocation2 + $0x48] sm:$0xf]
    %v146 = vld [vmem:[#allocation2 + $0x4c] sm:$0xf]
    %v147 = vld [vmem:[#allocation2 + $0x50] sm:$0xf]
    %v148 = vld [vmem:[#allocation2 + $0x54] sm:$0xf]
    %v149 = vld [vmem:[#allocation2 + $0x58] sm:$0xf]
    %v150 = vld [vmem:[#allocation2 + $0x5c] sm:$0xf]
    %v151 = vld [vmem:[#allocation2 + $0x60] sm:$0xf]
    %v152 = vld [vmem:[#allocation2 + $0x64] sm:$0xf]
    %v153 = vld [vmem:[#allocation2 + $0x68] sm:$0xf]
    %v154 = vld [vmem:[#allocation2 + $0x6c] sm:$0xf]
    %v155 = vld [vmem:[#allocation2 + $0x70] sm:$0xf]
    %v156 = vld [vmem:[#allocation2 + $0x74] sm:$0xf]
    %v157 = vld [vmem:[#allocation2 + $0x78] sm:$0xf]
    %v158 = vld [vmem:[#allocation2 + $0x7c] sm:$0xf]
    %v159 = vld [vmem:[#allocation2 + $0x80] sm:$0xf]
    %v160 = vld [vmem:[#allocation2 + $0x84] sm:$0xf]
    %v161 = vld [vmem:[#allocation2 + $0x88] sm:$0xf]
    %v162 = vld [vmem:[#allocation2 + $0x8c] sm:$0xf]
    %v163 = vld [vmem:[#allocation2 + $0x90] sm:$0xf]
    %v164 = vld [vmem:[#allocation2 + $0x94] sm:$0xf]
    %v165 = vld [vmem:[#allocation2 + $0x98] sm:$0xf]
    %v166 = vld [vmem:[#allocation2 + $0x9c] sm:$0xf]
    %v167 = vld [vmem:[#allocation2 + $0xa0] sm:$0xf]
    %v168 = vld [vmem:[#allocation2 + $0xa4] sm:$0xf]
    %v169 = vld [vmem:[#allocation2 + $0xa8] sm:$0xf]
    %v170 = vld [vmem:[#allocation2 + $0xac] sm:$0xf]
    %v171 = vld [vmem:[#allocation2 + $0xb0] sm:$0xf]
    %v172 = vld [vmem:[#allocation2 + $0xb4] sm:$0xf]
    %v173 = vld [vmem:[#allocation2 + $0xb8] sm:$0xf]
    %v174 = vld [vmem:[#allocation2 + $0xbc] sm:$0xf]
    %v175 = vld [vmem:[#allocation2 + $0xc0] sm:$0xf]
    %v176 = vld [vmem:[#allocation2 + $0xc4] sm:$0xf]
    %v177 = vld [vmem:[#allocation2 + $0xc8] sm:$0xf]
    %v178 = vld [vmem:[#allocation2 + $0xcc] sm:$0xf]
    %v179 = vld [vmem:[#allocation2 + $0xd0] sm:$0xf]
    %v180 = vld [vmem:[#allocation2 + $0xd4] sm:$0xf]
    %v181 = vld [vmem:[#allocation2 + $0xd8] sm:$0xf]
    %v182 = vld [vmem:[#allocation2 + $0xdc] sm:$0xf]
    %v183 = vld [vmem:[#allocation2 + $0xe0] sm:$0xf]
    %v184 = vld [vmem:[#allocation2 + $0xe4] sm:$0xf]
    %v185 = vld [vmem:[#allocation2 + $0xe8] sm:$0xf]
    %v186 = vld [vmem:[#allocation2 + $0xec] sm:$0xf]
    %v187 = vld [vmem:[#allocation2 + $0xf0] sm:$0xf]
    %v188 = vld [vmem:[#allocation2 + $0xf4] sm:$0xf]
    %v189 = vld [vmem:[#allocation2 + $0xf8] sm:$0xf]
    %v190 = vld [vmem:[#allocation2 + $0xfc] sm:$0xf]
    %v191 = vld [vmem:[#allocation2 + $0x100] sm:$0xf]
    %v192 = vld [vmem:[#allocation2 + $0x104] sm:$0xf]
    %v193 = vld [vmem:[#allocation2 + $0x108] sm:$0xf]
    %v194 = vld [vmem:[#allocation2 + $0x10c] sm:$0xf]
    %v195 = vld [vmem:[#allocation2 + $0x110] sm:$0xf]
    %v196 = vld [vmem:[#allocation2 + $0x114] sm:$0xf]
    %v197 = vld [vmem:[#allocation2 + $0x118] sm:$0xf]
    %v198 = vld [vmem:[#allocation2 + $0x11c] sm:$0xf]
    %v199 = vld [vmem:[#allocation2 + $0x120] sm:$0xf]
    %v200 = vld [vmem:[#allocation2 + $0x124] sm:$0xf]
    %v201 = vld [vmem:[#allocation2 + $0x128] sm:$0xf]
    %v202 = vld [vmem:[#allocation2 + $0x12c] sm:$0xf]
    %v203 = vld [vmem:[#allocation2 + $0x130] sm:$0xf]
    %v204 = vld [vmem:[#allocation2 + $0x134] sm:$0xf]
    %v205 = vld [vmem:[#allocation2 + $0x138] sm:$0xf]
    %v206 = vld [vmem:[#allocation2 + $0x13c] sm:$0xf]
    %v207 = vld [vmem:[#allocation2 + $0x140] sm:$0xf]
    %v208 = vld [vmem:[#allocation2 + $0x144] sm:$0xf]
    %v209 = vld [vmem:[#allocation2 + $0x148] sm:$0xf]
    %v210 = vld [vmem:[#allocation2 + $0x14c] sm:$0xf]
    %v211 = vld [vmem:[#allocation2 + $0x150] sm:$0xf]
    %v212 = vld [vmem:[#allocation2 + $0x154] sm:$0xf]
    %v213 = vld [vmem:[#allocation2 + $0x158] sm:$0xf]
    %v214 = vld [vmem:[#allocation2 + $0x15c] sm:$0xf]
    %v215 = vld [vmem:[#allocation2 + $0x160] sm:$0xf]
    %v216 = vld [vmem:[#allocation2 + $0x164] sm:$0xf]
    %v217 = vld [vmem:[#allocation2 + $0x168] sm:$0xf]
    %v218 = vld [vmem:[#allocation2 + $0x16c] sm:$0xf]
    %v219 = vld [vmem:[#allocation2 + $0x170] sm:$0xf]
    %v220 = vld [vmem:[#allocation2 + $0x174] sm:$0xf]
    %v221 = vld [vmem:[#allocation2 + $0x178] sm:$0xf]
    %v222 = vld [vmem:[#allocation2 + $0x17c] sm:$0xf]
    %v223 = vld [vmem:[#allocation2 + $0x180] sm:$0xf]
    %v224 = vld [vmem:[#allocation2 + $0x184] sm:$0xf]
    %v225 = vld [vmem:[%s2] sm:$0x1]
    %v227 = vperm.slane %v225, 0
    %v327 = vunpack.c.l.b16 %v127
    %v328 = vunpack.c.l.b16 %v128
    %v329 = vunpack.c.l.b16 %v129
    %v330 = vunpack.c.l.b16 %v130
    %v331 = vunpack.c.l.b16 %v131
    %v332 = vunpack.c.l.b16 %v132
    %v333 = vunpack.c.l.b16 %v133
    %v334 = vunpack.c.l.b16 %v134
    %v335 = vunpack.c.l.b16 %v135
    %v336 = vunpack.c.l.b16 %v136
    %v337 = vunpack.c.l.b16 %v137
    %v338 = vunpack.c.l.b16 %v138
    %v339 = vunpack.c.l.b16 %v139
    %v340 = vunpack.c.l.b16 %v140
    %v341 = vunpack.c.l.b16 %v141
    %v342 = vunpack.c.l.b16 %v142
    %v343 = vunpack.c.l.b16 %v143
    %v344 = vunpack.c.l.b16 %v144
    %v345 = vunpack.c.l.b16 %v145
    %v346 = vunpack.c.l.b16 %v146
    %v347 = vunpack.c.l.b16 %v147
    %v348 = vunpack.c.l.b16 %v148
    %v349 = vunpack.c.l.b16 %v149
    %v350 = vunpack.c.l.b16 %v150
    %v351 = vunpack.c.l.b16 %v151
    %v352 = vunpack.c.l.b16 %v152
    %v353 = vunpack.c.l.b16 %v153
    %v354 = vunpack.c.l.b16 %v154
    %v355 = vunpack.c.l.b16 %v155
    %v356 = vunpack.c.l.b16 %v156
    %v357 = vunpack.c.l.b16 %v157
    %v358 = vunpack.c.l.b16 %v158
    %v359 = vunpack.c.l.b16 %v159
    %v360 = vunpack.c.l.b16 %v160
    %v361 = vunpack.c.l.b16 %v161
    %v362 = vunpack.c.l.b16 %v162
    %v363 = vunpack.c.l.b16 %v163
    %v364 = vunpack.c.l.b16 %v164
    %v365 = vunpack.c.l.b16 %v165
    %v366 = vunpack.c.l.b16 %v166
    %v367 = vunpack.c.l.b16 %v167
    %v368 = vunpack.c.l.b16 %v168
    %v369 = vunpack.c.l.b16 %v169
    %v370 = vunpack.c.l.b16 %v170
    %v371 = vunpack.c.l.b16 %v171
    %v372 = vunpack.c.l.b16 %v172
    %v373 = vunpack.c.l.b16 %v173
    %v374 = vunpack.c.l.b16 %v174
    %v375 = vunpack.c.l.b16 %v175
    %v376 = vunpack.c.l.b16 %v176
    %v377 = vunpack.c.l.b16 %v177
    %v378 = vunpack.c.l.b16 %v178
    %v379 = vunpack.c.l.b16 %v179
    %v380 = vunpack.c.l.b16 %v180
    %v381 = vunpack.c.l.b16 %v181
    %v382 = vunpack.c.l.b16 %v182
    %v383 = vunpack.c.l.b16 %v183
    %v384 = vunpack.c.l.b16 %v184
    %v385 = vunpack.c.l.b16 %v185
    %v386 = vunpack.c.l.b16 %v186
    %v387 = vunpack.c.l.b16 %v187
    %v388 = vunpack.c.l.b16 %v188
    %v389 = vunpack.c.l.b16 %v189
    %v390 = vunpack.c.l.b16 %v190
    %v391 = vunpack.c.l.b16 %v191
    %v392 = vunpack.c.l.b16 %v192
    %v393 = vunpack.c.l.b16 %v193
    %v394 = vunpack.c.l.b16 %v194
    %v395 = vunpack.c.l.b16 %v195
    %v396 = vunpack.c.l.b16 %v196
    %v397 = vunpack.c.l.b16 %v197
    %v398 = vunpack.c.l.b16 %v198
    %v399 = vunpack.c.l.b16 %v199
    %v400 = vunpack.c.l.b16 %v200
    %v401 = vunpack.c.l.b16 %v201
    %v402 = vunpack.c.l.b16 %v202
    %v403 = vunpack.c.l.b16 %v203
    %v404 = vunpack.c.l.b16 %v204
    %v405 = vunpack.c.l.b16 %v205
    %v406 = vunpack.c.l.b16 %v206
    %v407 = vunpack.c.l.b16 %v207
    %v408 = vunpack.c.l.b16 %v208
    %v409 = vunpack.c.l.b16 %v209
    %v410 = vunpack.c.l.b16 %v210
    %v411 = vunpack.c.l.b16 %v211
    %v412 = vunpack.c.l.b16 %v212
    %v413 = vunpack.c.l.b16 %v213
    %v414 = vunpack.c.l.b16 %v214
    %v415 = vunpack.c.l.b16 %v215
    %v416 = vunpack.c.l.b16 %v216
    %v417 = vunpack.c.l.b16 %v217
    %v418 = vunpack.c.l.b16 %v218
    %v419 = vunpack.c.l.b16 %v219
    %v420 = vunpack.c.l.b16 %v220
    %v421 = vunpack.c.l.b16 %v221
    %v422 = vunpack.c.l.b16 %v222
    %v423 = vunpack.c.l.b16 %v223
    %v424 = vunpack.c.l.b16 %v224
    %v425 = vpack.c.b16 %v328, %v327
    %v426 = vpack.c.b16 %v330, %v329
    %v427 = vpack.c.b16 %v332, %v331
    %v428 = vpack.c.b16 %v334, %v333
    %v429 = vpack.c.b16 %v336, %v335
    %v430 = vpack.c.b16 %v338, %v337
    %v431 = vpack.c.b16 %v340, %v339
    %v432 = vpack.c.b16 %v342, %v341
    %v433 = vpack.c.b16 %v344, %v343
    %v434 = vpack.c.b16 %v346, %v345
    %v435 = vpack.c.b16 %v348, %v347
    %v436 = vpack.c.b16 %v350, %v349
    %v437 = vpack.c.b16 %v352, %v351
    %v438 = vpack.c.b16 %v354, %v353
    %v439 = vpack.c.b16 %v356, %v355
    %v440 = vpack.c.b16 %v358, %v357
    %v441 = vpack.c.b16 %v360, %v359
    %v442 = vpack.c.b16 %v362, %v361
    %v443 = vpack.c.b16 %v364, %v363
    %v444 = vpack.c.b16 %v366, %v365
    %v445 = vpack.c.b16 %v368, %v367
    %v446 = vpack.c.b16 %v370, %v369
    %v447 = vpack.c.b16 %v372, %v371
    %v448 = vpack.c.b16 %v374, %v373
    %v449 = vpack.c.b16 %v376, %v375
    %v450 = vpack.c.b16 %v378, %v377
    %v451 = vpack.c.b16 %v380, %v379
    %v452 = vpack.c.b16 %v382, %v381
    %v453 = vpack.c.b16 %v384, %v383
    %v454 = vpack.c.b16 %v386, %v385
    %v455 = vpack.c.b16 %v388, %v387
    %v456 = vpack.c.b16 %v390, %v389
    %v457 = vpack.c.b16 %v392, %v391
    %v458 = vpack.c.b16 %v394, %v393
    %v459 = vpack.c.b16 %v396, %v395
    %v460 = vpack.c.b16 %v398, %v397
    %v461 = vpack.c.b16 %v400, %v399
    %v462 = vpack.c.b16 %v402, %v401
    %v463 = vpack.c.b16 %v404, %v403
    %v464 = vpack.c.b16 %v406, %v405
    %v465 = vpack.c.b16 %v408, %v407
    %v466 = vpack.c.b16 %v410, %v409
    %v467 = vpack.c.b16 %v412, %v411
    %v468 = vpack.c.b16 %v414, %v413
    %v469 = vpack.c.b16 %v416, %v415
    %v470 = vpack.c.b16 %v418, %v417
    %v471 = vpack.c.b16 %v420, %v419
    %v472 = vpack.c.b16 %v422, %v421
    %v473 = vpack.c.b16 %v424, %v423
    %vm523 = vcmask 130048
    %v525 = vsel %vm523, %v126, 0
    %527 = vmatpush.bf16.msra.mxu0 %v432
    %528 = vmatpush.bf16.msra.mxu0 %v431
    %529 = vmatpush.bf16.msra.mxu0 %v430
    %530 = vmatpush.bf16.msra.mxu0 %v429
    %531 = vmatpush.bf16.msra.mxu0 %v428
    %532 = vmatpush.bf16.msra.mxu0 %v427
    %533 = vmatpush.bf16.msra.mxu0 %v426
    %534 = vmatpush.bf16.msra.mxu0 %v425
    %535 = vmatmul.bf16.gmra.mxu0 %v120
    %v536 = vpop.f32.mrf.mxu0
    %v537 = vadd.f32 %v227, %v536
    %v538 = vpop.f32.mrf.mxu0
    %v539 = vadd.f32 %v227, %v538
    %540 = vdwg.mxu0
    %541 = vmatpush.bf16.msra.mxu0 %v440
    %542 = vmatpush.bf16.msra.mxu0 %v439
    %543 = vmatpush.bf16.msra.mxu0 %v438
    %544 = vmatpush.bf16.msra.mxu0 %v437
    %545 = vmatpush.bf16.msra.mxu0 %v436
    %546 = vmatpush.bf16.msra.mxu0 %v435
    %547 = vmatpush.bf16.msra.mxu0 %v434
    %548 = vmatpush.bf16.msra.mxu0 %v433
    %549 = vmatmul.bf16.gmra.mxu0 %v121
    %v550 = vpop.f32.mrf.mxu0
    %v551 = vadd.f32 %v537, %v550
    %v552 = vpop.f32.mrf.mxu0
    %v553 = vadd.f32 %v539, %v552
    %554 = vdwg.mxu0
    %555 = vmatpush.bf16.msra.mxu0 %v448
    %556 = vmatpush.bf16.msra.mxu0 %v447
    %557 = vmatpush.bf16.msra.mxu0 %v446
    %558 = vmatpush.bf16.msra.mxu0 %v445
    %559 = vmatpush.bf16.msra.mxu0 %v444
    %560 = vmatpush.bf16.msra.mxu0 %v443
    %561 = vmatpush.bf16.msra.mxu0 %v442
    %562 = vmatpush.bf16.msra.mxu0 %v441
    %563 = vmatmul.bf16.gmra.mxu0 %v122
    %v564 = vpop.f32.mrf.mxu0
    %v565 = vadd.f32 %v551, %v564
    %v566 = vpop.f32.mrf.mxu0
    %v567 = vadd.f32 %v553, %v566
    %568 = vdwg.mxu0
    %569 = vmatpush.bf16.msra.mxu0 %v456
    %570 = vmatpush.bf16.msra.mxu0 %v455
    %571 = vmatpush.bf16.msra.mxu0 %v454
    %572 = vmatpush.bf16.msra.mxu0 %v453
    %573 = vmatpush.bf16.msra.mxu0 %v452
    %574 = vmatpush.bf16.msra.mxu0 %v451
    %575 = vmatpush.bf16.msra.mxu0 %v450
    %576 = vmatpush.bf16.msra.mxu0 %v449
    %577 = vmatmul.bf16.gmra.mxu0 %v123
    %v578 = vpop.f32.mrf.mxu0
    %v579 = vadd.f32 %v565, %v578
    %v580 = vpop.f32.mrf.mxu0
    %v581 = vadd.f32 %v567, %v580
    %582 = vdwg.mxu0
    %583 = vmatpush.bf16.msra.mxu0 %v464
    %584 = vmatpush.bf16.msra.mxu0 %v463
    %585 = vmatpush.bf16.msra.mxu0 %v462
    %586 = vmatpush.bf16.msra.mxu0 %v461
    %587 = vmatpush.bf16.msra.mxu0 %v460
    %588 = vmatpush.bf16.msra.mxu0 %v459
    %589 = vmatpush.bf16.msra.mxu0 %v458
    %590 = vmatpush.bf16.msra.mxu0 %v457
    %591 = vmatmul.bf16.gmra.mxu0 %v124
    %v592 = vpop.f32.mrf.mxu0
    %v593 = vadd.f32 %v579, %v592
    %v594 = vpop.f32.mrf.mxu0
    %v595 = vadd.f32 %v581, %v594
    %596 = vdwg.mxu0
    %597 = vmatpush.bf16.msra.mxu0 %v472
    %598 = vmatpush.bf16.msra.mxu0 %v471
    %599 = vmatpush.bf16.msra.mxu0 %v470
    %600 = vmatpush.bf16.msra.mxu0 %v469
    %601 = vmatpush.bf16.msra.mxu0 %v468
    %602 = vmatpush.bf16.msra.mxu0 %v467
    %603 = vmatpush.bf16.msra.mxu0 %v466
    %604 = vmatpush.bf16.msra.mxu0 %v465
    %605 = vmatmul.bf16.gmra.mxu0 %v125
    %v606 = vpop.f32.mrf.mxu0
    %v607 = vadd.f32 %v593, %v606
    %v608 = vpop.f32.mrf.mxu0
    %v609 = vadd.f32 %v595, %v608
    %610 = vdwg.mxu0
    %611 = vmatpush.bf16.msra.mxu0 0
    %612 = vmatpush.bf16.msra.mxu0 0
    %613 = vmatpush.bf16.msra.mxu0 0
    %614 = vmatpush.bf16.msra.mxu0 0
    %615 = vmatpush.bf16.msra.mxu0 0
    %616 = vmatpush.bf16.msra.mxu0 0
    %617 = vmatpush.bf16.msra.mxu0 0
    %618 = vmatpush.bf16.msra.mxu0 %v473
    %619 = vmatmul.bf16.gmra.mxu0 %v525
    %v620 = vpop.f32.mrf.mxu0
    %v621 = vadd.f32 %v607, %v620
    %v622 = vpop.f32.mrf.mxu0
    %v623 = vadd.f32 %v609, %v622
    %624 = vdwg.mxu0
    %v625 = vmax.f32 %v621, 0.0
    %v626 = vmax.f32 %v623, 0.0
    %v627 = vpack.c.bf16 %v626, %v625
    %v628 = vld [vmem:[%s3] sm:$0xf]
    %v629 = vld [vmem:[%s3 + $0x4] sm:$0xf]
    %v630 = vld [vmem:[%s3 + $0x8] sm:$0xf]
    %v631 = vld [vmem:[%s3 + $0xc] sm:$0xf]
    %v632 = vld [vmem:[%s3 + $0x10] sm:$0xf]
    %v633 = vld [vmem:[%s3 + $0x14] sm:$0xf]
    %v634 = vld [vmem:[%s3 + $0x18] sm:$0xf]
    %v635 = vld [vmem:[%s3 + $0x1c] sm:$0xf]
    %v636 = vld [vmem:[%s3 + $0x20] sm:$0xf]
    %v637 = vld [vmem:[%s3 + $0x24] sm:$0xf]
    %v638 = vld [vmem:[%s3 + $0x28] sm:$0xf]
    %v639 = vld [vmem:[%s3 + $0x2c] sm:$0xf]
    %v640 = vld [vmem:[%s3 + $0x30] sm:$0xf]
    %v641 = vld [vmem:[%s3 + $0x34] sm:$0xf]
    %v642 = vld [vmem:[%s3 + $0x38] sm:$0xf]
    %v643 = vld [vmem:[%s3 + $0x3c] sm:$0xf]
    %v644 = vld [vmem:[%s4] sm:$0x1]
    %v646 = vperm.slane %v644, 0
    %v664 = vunpack.c.l.b16 %v628
    %v665 = vunpack.c.l.b16 %v629
    %v666 = vunpack.c.l.b16 %v630
    %v667 = vunpack.c.l.b16 %v631
    %v668 = vunpack.c.l.b16 %v632
    %v669 = vunpack.c.l.b16 %v633
    %v670 = vunpack.c.l.b16 %v634
    %v671 = vunpack.c.l.b16 %v635
    %v672 = vunpack.c.l.b16 %v636
    %v673 = vunpack.c.l.b16 %v637
    %v674 = vunpack.c.l.b16 %v638
    %v675 = vunpack.c.l.b16 %v639
    %v676 = vunpack.c.l.b16 %v640
    %v677 = vunpack.c.l.b16 %v641
    %v678 = vunpack.c.l.b16 %v642
    %v679 = vunpack.c.l.b16 %v643
    %v680 = vpack.c.b16 %v665, %v664
    %v681 = vpack.c.b16 %v667, %v666
    %v682 = vpack.c.b16 %v669, %v668
    %v683 = vpack.c.b16 %v671, %v670
    %v684 = vpack.c.b16 %v673, %v672
    %v685 = vpack.c.b16 %v675, %v674
    %v686 = vpack.c.b16 %v677, %v676
    %v687 = vpack.c.b16 %v679, %v678
    %696 = vmatpush.bf16.msra.mxu0 %v687
    %697 = vmatpush.bf16.msra.mxu0 %v686
    %698 = vmatpush.bf16.msra.mxu0 %v685
    %699 = vmatpush.bf16.msra.mxu0 %v684
    %700 = vmatpush.bf16.msra.mxu0 %v683
    %701 = vmatpush.bf16.msra.mxu0 %v682
    %702 = vmatpush.bf16.msra.mxu0 %v681
    %703 = vmatpush.bf16.msra.mxu0 %v680
    %704 = vmatmul.bf16.gmra.mxu0 %v627
    %v705 = vpop.f32.mrf.mxu0
    %v706 = vadd.f32 %v646, %v705
    %v707 = vpop.f32.mrf.mxu0
    %v708 = vadd.f32 %v646, %v707
    %709 = vdwg.mxu0
    %v710 = vmax.f32 %v706, 0.0
    %v711 = vmax.f32 %v708, 0.0
    %v712 = vpack.c.bf16 %v710, %v710
    %v713 = vpack.c.bf16 %v711, %v711
    %v716 = vrot.slane %v712, 3
    %v717 = vrot.slane %v713, 3
    %vm718 = vcmask 1040384
    %v721 = vsel %vm718, %v712, %v716
    %vm722 = vcmask 1041409
    %v723 = vsel %vm722, %v712, %v716
    %v725 = vrot.slane %v723, 1
    %vm726 = vcmask 1042434
    %v727 = vsel %vm726, %v712, %v716
    %v729 = vrot.slane %v727, 2
    %vm730 = vcmask 1043459
    %v731 = vsel %vm730, %v712, %v716
    %v733 = vrot.slane %v731, 3
    %v736 = vsel %vm718, %v713, %v717
    %v737 = vsel %vm722, %v713, %v717
    %v739 = vrot.slane %v737, 1
    %v740 = vsel %vm726, %v713, %v717
    %v742 = vrot.slane %v740, 2
    %v743 = vsel %vm730, %v713, %v717
    %v745 = vrot.slane %v743, 3
    %754 = vst [vmem:[#allocation4] sm:$0x1] %v721
    %755 = vst [vmem:[#allocation4 + $0x1] sm:$0x1] %v725
    %756 = vst [vmem:[#allocation4 + $0x2] sm:$0x1] %v729
    %757 = vst [vmem:[#allocation4 + $0x3] sm:$0x1] %v733
    %758 = vst [vmem:[#allocation4 + $0x4] sm:$0x1] %v736
    %759 = vst [vmem:[#allocation4 + $0x5] sm:$0x1] %v739
    %760 = vst [vmem:[#allocation4 + $0x6] sm:$0x1] %v742
    %761 = vst [vmem:[#allocation4 + $0x7] sm:$0x1] %v745
    // Predicated region
    $region26: #{mlp_net0_forward.1} parent=1 // pred_check
      _
    $region27: #{mlp_net0_forward.1} parent=1 // pred_check_branch
      %763 = sbr.rel (0) target = $region29
    $region28: #{mlp_net0_forward.1} parent=1 // pred_region
      // Predicated region
      $region30: #{mlp_net0_forward.1} parent=28 // pred_check
        _
      $region31: #{mlp_net0_forward.1} parent=28 // pred_check_branch
        %765 = sbr.rel (0) target = $region33
      $region32: #{mlp_net0_forward.1} parent=28 // pred_region
        // Predicated region
        $region34: #{mlp_net0_forward.1} parent=32 // pred_check
          _
        $region35: #{mlp_net0_forward.1} parent=32 // pred_check_branch
          %767 = sbr.rel target = $region37
        $region36: #{mlp_net0_forward.1} parent=32 // pred_region
          // Predicated region
          $region49: #{mlp_net0_forward.1} parent=36 // pred_check
            _
          $region50: #{mlp_net0_forward.1} parent=36 // pred_check_branch
            %783 = sbr.rel (0) target = $region52
          $region51: #{mlp_net0_forward.1} parent=36 // pred_region
            %s785 = ssub.s32 2, 1
            loop: start=0, step=1, limit=1
            $region53: #{mlp_net0_forward.1} parent=51 // loop_pre_header
              _
            $region54: #{mlp_net0_forward.1} parent=51 // loop_header
              %s787 = sphi 0, %s791
              %p788 = scmp.ge.s32.totalorder %s787, 1
              %s792 = sphi [#allocation4], [#allocation4]
              %s793 = sphi %s5, %s5
            $region55: #{mlp_net0_forward.1} parent=51 // loop_header_branch
              %790 = sbr.rel (%p788) target = $region59
            $region56: #{mlp_net0_forward.1} parent=51 // loop_body
              %v794 = vld [vmem:[%s792] sm:%s785]
              %795 = vst [vmem:[%s793] sm:%s785] %v794
            $region57: #{mlp_net0_forward.1} parent=51 // loop_footer
              %s791 = sadd.s32 1, %s787
            $region58: #{mlp_net0_forward.1} parent=51 // loop_footer_branch
              %786 = sbr.rel target = $region54
            $region59: #{mlp_net0_forward.1} parent=51 // loop_exit
              _
          $region52: #{mlp_net0_forward.1} parent=36 // pred_fallthru
            _
        $region37: #{mlp_net0_forward.1} parent=32 // pred_fallthru
          _
        // Predicated region
        $region38: #{mlp_net0_forward.1} parent=32 // pred_check
          _
        $region39: #{mlp_net0_forward.1} parent=32 // pred_check_branch
          %769 = sbr.rel (0) target = $region41
        $region40: #{mlp_net0_forward.1} parent=32 // pred_region
          %s771 = ssub.s32 2, 1
          loop: start=0, step=1, limit=1
          $region42: #{mlp_net0_forward.1} parent=40 // loop_pre_header
            _
          $region43: #{mlp_net0_forward.1} parent=40 // loop_header
            %s773 = sphi 0, %s777
            %p774 = scmp.ge.s32.totalorder %s773, 1
            %s778 = sphi [#allocation4], [#allocation4]
            %s779 = sphi %s5, %s5
          $region44: #{mlp_net0_forward.1} parent=40 // loop_header_branch
            %776 = sbr.rel (%p774) target = $region48
          $region45: #{mlp_net0_forward.1} parent=40 // loop_body
            %v780 = vld [vmem:[%s778] sm:%s771]
            %781 = vst [vmem:[%s779] sm:%s771] %v780
          $region46: #{mlp_net0_forward.1} parent=40 // loop_footer
            %s777 = sadd.s32 1, %s773
          $region47: #{mlp_net0_forward.1} parent=40 // loop_footer_branch
            %772 = sbr.rel target = $region43
          $region48: #{mlp_net0_forward.1} parent=40 // loop_exit
            _
        $region41: #{mlp_net0_forward.1} parent=32 // pred_fallthru
          _
      $region33: #{mlp_net0_forward.1} parent=28 // pred_fallthru
        _
      %796 = vnop
    $region29: #{mlp_net0_forward.1} parent=1 // pred_fallthru
      _
    // Predicated region
    $region60: #{mlp_net0_forward.1} parent=1 // pred_check
      _
    $region61: #{mlp_net0_forward.1} parent=1 // pred_check_branch
      %798 = sbr.rel (0) target = $region63
    $region62: #{mlp_net0_forward.1} parent=1 // pred_region
      _
    $region63: #{mlp_net0_forward.1} parent=1 // pred_fallthru
      _
    %799 = vsyncpa [#allocation3], 1

</llo_original>
